<compile_context>
chip_gen: v5e
topology: v5e:2x2
jax: 0.10.0
libtpu: 0.0.40
codegen_flags: <defaults>
</compile_context>

<pallas_src>
import jax
import jax.numpy as jnp
from jax.experimental import pallas as pl
from jax.experimental.pallas import tpu as pltpu

N_STATES = 4
N_ACTIONS = 2
HIDDEN = 128


def _round_up(x, m):
    return ((x + m - 1) // m) * m


def net_kernel(xt_ref, w1_ref, b1_ref, w2d_ref, bd_ref, o_ref):
    xt = xt_ref[...]          # (N_STATES, TB)   batch on lanes
    w1 = w1_ref[...]          # (HIDDEN, N_STATES) == PyTorch fc1.weight
    b1 = b1_ref[...]          # (HIDDEN, 1)
    w2d = w2d_ref[...]        # (HIDDEN, 1)  == fc2.weight[1] - fc2.weight[0]
    bd = bd_ref[...]          # (1, 1)       == fc2.bias[1]  - fc2.bias[0]

    # fc1 on the VPU: K=4 static unroll of broadcast mul-adds (no MXU).
    # h[j, b] = sum_k w1[j, k] * x[b, k] + b1[j]
    h = w1[:, 0:1] * xt[0:1, :] + b1
    for k in range(1, N_STATES):
        h = h + w1[:, k:k + 1] * xt[k:k + 1, :]

    # TODO(synk): nn.Dropout(0.5) is identity in eval mode; training-mode
    # stochastic masking with 2x rescale (pltpu.prng_*) is not reproduced here.

    # relu
    h = jnp.maximum(h, 0.0)

    # fc2 + softmax over the 2 actions, collapsed to a sigmoid of the logit
    # difference: d = (w2[1]-w2[0])·h + (b2[1]-b2[0]);  p1 = sigmoid(d).
    d = jnp.sum(h * w2d, axis=0, keepdims=True) + bd     # (1, TB)
    p1 = 1.0 / (1.0 + jnp.exp(-d))                        # exact (EUP exp)
    o_ref[1:2, :] = p1
    o_ref[0:1, :] = 1.0 - p1


def net_forward(x, w1, b1, w2, b2, *, tb=256):
    """Forward pass of Net.

    x : (B, N_STATES) f32
    w1: (HIDDEN, N_STATES)  == PyTorch fc1.weight
    b1: (HIDDEN,)           == PyTorch fc1.bias
    w2: (N_ACTIONS, HIDDEN) == PyTorch fc2.weight
    b2: (N_ACTIONS,)        == PyTorch fc2.bias
    returns softmax probabilities, (B, N_ACTIONS) f32.
    """
    B = x.shape[0]

    # Batch-on-lanes layout + 2-class algebraic simplification (tiny wrapper ops).
    xt = x.T                                           # (N_STATES, B)
    b1c = b1.reshape(HIDDEN, 1)
    w2d = (w2[1] - w2[0]).reshape(HIDDEN, 1)
    bd = (b2[1] - b2[0]).reshape(1, 1)

    if B <= 128:
        # Single tile, no padding, no output slice.
        TB = B
        Bp = B
    else:
        # Multiple-of-128 lane tile (lane-dense blocks), capped at `tb`, and
        # small enough that the grid has >= 2 steps so v7x can use both TCs.
        TB = min(tb, _round_up(pl.cdiv(B, 2), 128))
        Bp = _round_up(B, TB)

    if Bp != B:
        xt = jnp.pad(xt, ((0, 0), (0, Bp - B)))

    out_t = pl.pallas_call(
        net_kernel,
        out_shape=jax.ShapeDtypeStruct((N_ACTIONS, Bp), jnp.float32),
        grid_spec=pltpu.PrefetchScalarGridSpec(
            num_scalar_prefetch=0,
            grid=(Bp // TB,),
            in_specs=[
                pl.BlockSpec((N_STATES, TB), lambda i: (0, i)),       # x^T tile
                pl.BlockSpec((HIDDEN, N_STATES), lambda i: (0, 0)),   # w1 resident
                pl.BlockSpec((HIDDEN, 1), lambda i: (0, 0)),          # b1 resident
                pl.BlockSpec((HIDDEN, 1), lambda i: (0, 0)),          # w2 diff resident
                pl.BlockSpec((1, 1), lambda i: (0, 0)),               # b2 diff resident
            ],
            out_specs=pl.BlockSpec((N_ACTIONS, TB), lambda i: (0, i)),  # lane-dense
        ),
        compiler_params=pltpu.CompilerParams(
            dimension_semantics=("parallel",)),
    )(xt, w1, b1c, w2d, bd)

    out = out_t.T                                      # (Bp, N_ACTIONS)
    if Bp != B:
        out = out[:B]
    return out


def init_params(key):
    """Deterministic init mimicking PyTorch nn.Linear default (U[-1/sqrt(fan_in), +]).

    Layouts match PyTorch exactly: fc1.weight (128,4), fc1.bias (128,),
    fc2.weight (2,128), fc2.bias (2,).
    """
    k1, k2, k3, k4 = jax.random.split(key, 4)
    bound1 = 1.0 / jnp.sqrt(jnp.float32(N_STATES))
    bound2 = 1.0 / jnp.sqrt(jnp.float32(HIDDEN))
    w1 = jax.random.uniform(k1, (HIDDEN, N_STATES), jnp.float32, -bound1, bound1)
    b1 = jax.random.uniform(k2, (HIDDEN,), jnp.float32, -bound1, bound1)
    w2 = jax.random.uniform(k3, (N_ACTIONS, HIDDEN), jnp.float32, -bound2, bound2)
    b2 = jax.random.uniform(k4, (N_ACTIONS,), jnp.float32, -bound2, bound2)
    return w1, b1, w2, b2


def _reference(x, w1, b1, w2, b2):
    h = jnp.maximum(x @ w1.T + b1, 0.0)
    logits = h @ w2.T + b2
    return jax.nn.softmax(logits, axis=1)


if __name__ == "__main__":
    key = jax.random.PRNGKey(0)
    k_x, k_x2, k_p = jax.random.split(key, 3)

    w1, b1, w2, b2 = init_params(k_p)

    # Small CartPole-style batch: single tile, no padding, no output slice.
    B = 8
    x = jax.random.normal(k_x, (B, N_STATES), jnp.float32)
    probs = jax.block_until_ready(net_forward(x, w1, b1, w2, b2))

    ref = _reference(x, w1, b1, w2, b2)
    assert probs.shape == (B, N_ACTIONS)
    assert jnp.allclose(probs, ref, atol=1e-5, rtol=0.0)
    assert jnp.allclose(jnp.sum(probs, axis=1), 1.0, atol=1e-5)

    # Larger, non-multiple batch: exercises the multi-tile (grid>1) + pad path.
    B2 = 300
    x2 = jax.random.normal(k_x2, (B2, N_STATES), jnp.float32)
    probs2 = jax.block_until_ready(net_forward(x2, w1, b1, w2, b2))
    ref2 = _reference(x2, w1, b1, w2, b2)
    assert probs2.shape == (B2, N_ACTIONS)
    assert jnp.allclose(probs2, ref2, atol=1e-5, rtol=0.0)

    print("KERNEL_OK")
</pallas_src>

<mosaic_0001>
module attributes {stable_mosaic.version = 11 : i64} {
  func.func @net_kernel(%arg0: i32, %arg1: memref<4x8xf32, #tpu.memory_space<vmem>>, %arg2: memref<128x4xf32, #tpu.memory_space<vmem>>, %arg3: memref<128x1xf32, #tpu.memory_space<vmem>>, %arg4: memref<128x1xf32, #tpu.memory_space<vmem>>, %arg5: memref<1x1xf32, #tpu.memory_space<vmem>>, %arg6: memref<2x8xf32, #tpu.memory_space<vmem>>) attributes {dimension_semantics = [#tpu.dimension_semantics<parallel>], iteration_bounds = array<i64: 1>, scalar_prefetch = 0 : i64, scratch_operands = 0 : i64, tpu.core_type = #tpu.core_type<tc>, window_params = [{transform_indices = @transform_0, window_bounds = array<i64: 4, 8>}, {pipeline_mode = #tpu.pipeline_mode<synchronous>, transform_indices = @transform_1, window_bounds = array<i64: 128, 4>}, {pipeline_mode = #tpu.pipeline_mode<synchronous>, transform_indices = @transform_2, window_bounds = array<i64: 128, 1>}, {pipeline_mode = #tpu.pipeline_mode<synchronous>, transform_indices = @transform_3, window_bounds = array<i64: 128, 1>}, {pipeline_mode = #tpu.pipeline_mode<synchronous>, transform_indices = @transform_4, window_bounds = array<i64: 1, 1>}, {transform_indices = @transform_5, window_bounds = array<i64: 2, 8>}]} {
    %c0 = arith.constant 0 : index
    %c0_0 = arith.constant 0 : index
    %0 = vector.load %arg1[%c0, %c0_0] : memref<4x8xf32, #tpu.memory_space<vmem>>, vector<4x8xf32>
    %c0_1 = arith.constant 0 : index
    %c0_2 = arith.constant 0 : index
    %1 = vector.load %arg2[%c0_1, %c0_2] : memref<128x4xf32, #tpu.memory_space<vmem>>, vector<128x4xf32>
    %c0_3 = arith.constant 0 : index
    %c0_4 = arith.constant 0 : index
    %2 = vector.load %arg3[%c0_3, %c0_4] : memref<128x1xf32, #tpu.memory_space<vmem>>, vector<128x1xf32>
    %c0_5 = arith.constant 0 : index
    %c0_6 = arith.constant 0 : index
    %3 = vector.load %arg4[%c0_5, %c0_6] : memref<128x1xf32, #tpu.memory_space<vmem>>, vector<128x1xf32>
    %c0_7 = arith.constant 0 : index
    %c0_8 = arith.constant 0 : index
    %4 = vector.load %arg5[%c0_7, %c0_8] : memref<1x1xf32, #tpu.memory_space<vmem>>, vector<1x1xf32>
    %5 = vector.extract_strided_slice %1 {offsets = [0, 0], sizes = [128, 1], strides = [1, 1]} : vector<128x4xf32> to vector<128x1xf32>
    %6 = vector.extract_strided_slice %0 {offsets = [0, 0], sizes = [1, 8], strides = [1, 1]} : vector<4x8xf32> to vector<1x8xf32>
    %7 = vector.broadcast %5 : vector<128x1xf32> to vector<128x8xf32>
    %8 = vector.broadcast %6 : vector<1x8xf32> to vector<128x8xf32>
    %9 = arith.mulf %7, %8 : vector<128x8xf32>
    %10 = vector.broadcast %2 : vector<128x1xf32> to vector<128x8xf32>
    %11 = arith.addf %9, %10 : vector<128x8xf32>
    %12 = vector.extract_strided_slice %1 {offsets = [0, 1], sizes = [128, 1], strides = [1, 1]} : vector<128x4xf32> to vector<128x1xf32>
    %13 = vector.extract_strided_slice %0 {offsets = [1, 0], sizes = [1, 8], strides = [1, 1]} : vector<4x8xf32> to vector<1x8xf32>
    %14 = vector.broadcast %12 : vector<128x1xf32> to vector<128x8xf32>
    %15 = vector.broadcast %13 : vector<1x8xf32> to vector<128x8xf32>
    %16 = arith.mulf %14, %15 : vector<128x8xf32>
    %17 = arith.addf %11, %16 : vector<128x8xf32>
    %18 = vector.extract_strided_slice %1 {offsets = [0, 2], sizes = [128, 1], strides = [1, 1]} : vector<128x4xf32> to vector<128x1xf32>
    %19 = vector.extract_strided_slice %0 {offsets = [2, 0], sizes = [1, 8], strides = [1, 1]} : vector<4x8xf32> to vector<1x8xf32>
    %20 = vector.broadcast %18 : vector<128x1xf32> to vector<128x8xf32>
    %21 = vector.broadcast %19 : vector<1x8xf32> to vector<128x8xf32>
    %22 = arith.mulf %20, %21 : vector<128x8xf32>
    %23 = arith.addf %17, %22 : vector<128x8xf32>
    %24 = vector.extract_strided_slice %1 {offsets = [0, 3], sizes = [128, 1], strides = [1, 1]} : vector<128x4xf32> to vector<128x1xf32>
    %25 = vector.extract_strided_slice %0 {offsets = [3, 0], sizes = [1, 8], strides = [1, 1]} : vector<4x8xf32> to vector<1x8xf32>
    %26 = vector.broadcast %24 : vector<128x1xf32> to vector<128x8xf32>
    %27 = vector.broadcast %25 : vector<1x8xf32> to vector<128x8xf32>
    %28 = arith.mulf %26, %27 : vector<128x8xf32>
    %29 = arith.addf %23, %28 : vector<128x8xf32>
    %cst = arith.constant 0.000000e+00 : f32
    %30 = vector.broadcast %cst : f32 to vector<128x8xf32>
    %31 = arith.maximumf %29, %30 : vector<128x8xf32>
    %32 = vector.broadcast %3 : vector<128x1xf32> to vector<128x8xf32>
    %33 = arith.mulf %31, %32 : vector<128x8xf32>
    %cst_9 = arith.constant dense<0.000000e+00> : vector<8xf32>
    %34 = vector.multi_reduction <add>, %33, %cst_9 [0] : vector<128x8xf32> to vector<8xf32>
    %35 = vector.shape_cast %34 : vector<8xf32> to vector<1x8xf32>
    %36 = vector.broadcast %4 : vector<1x1xf32> to vector<1x8xf32>
    %37 = arith.addf %35, %36 : vector<1x8xf32>
    %cst_10 = arith.constant 0.000000e+00 : f32
    %38 = vector.broadcast %cst_10 : f32 to vector<1x8xf32>
    %39 = arith.subf %38, %37 : vector<1x8xf32>
    %40 = math.exp %39 : vector<1x8xf32>
    %cst_11 = arith.constant 1.000000e+00 : f32
    %41 = vector.broadcast %cst_11 : f32 to vector<1x8xf32>
    %42 = arith.addf %41, %40 : vector<1x8xf32>
    %cst_12 = arith.constant 1.000000e+00 : f32
    %43 = vector.broadcast %cst_12 : f32 to vector<1x8xf32>
    %44 = arith.divf %43, %42 : vector<1x8xf32>
    %c1 = arith.constant 1 : index
    %c0_13 = arith.constant 0 : index
    %45 = vector.load %arg6[%c1, %c0_13] : memref<2x8xf32, #tpu.memory_space<vmem>>, vector<1x8xf32>
    tpu.vector_store %arg6[%c1, %c0_13], %44 {strides = array<i32>} : memref<2x8xf32, #tpu.memory_space<vmem>>, vector<1x8xf32>,
    %cst_14 = arith.constant 1.000000e+00 : f32
    %46 = vector.broadcast %cst_14 : f32 to vector<1x8xf32>
    %47 = arith.subf %46, %44 : vector<1x8xf32>
    %c0_15 = arith.constant 0 : index
    %c0_16 = arith.constant 0 : index
    %48 = vector.load %arg6[%c0_15, %c0_16] : memref<2x8xf32, #tpu.memory_space<vmem>>, vector<1x8xf32>
    tpu.vector_store %arg6[%c0_15, %c0_16], %47 {strides = array<i32>} : memref<2x8xf32, #tpu.memory_space<vmem>>, vector<1x8xf32>,
    return
  }
  func.func @transform_0(%arg0: i32) -> (i32, i32) {
    %c0_i32 = arith.constant 0 : i32
    %c0_i32_0 = arith.constant 0 : i32
    return %c0_i32, %arg0 : i32, i32
  }
  func.func @transform_1(%arg0: i32) -> (i32, i32) {
    %c0_i32 = arith.constant 0 : i32
    %c0_i32_0 = arith.constant 0 : i32
    %c0_i32_1 = arith.constant 0 : i32
    return %c0_i32, %c0_i32_0 : i32, i32
  }
  func.func @transform_2(%arg0: i32) -> (i32, i32) {
    %c0_i32 = arith.constant 0 : i32
    %c0_i32_0 = arith.constant 0 : i32
    %c0_i32_1 = arith.constant 0 : i32
    return %c0_i32, %c0_i32_0 : i32, i32
  }
  func.func @transform_3(%arg0: i32) -> (i32, i32) {
    %c0_i32 = arith.constant 0 : i32
    %c0_i32_0 = arith.constant 0 : i32
    %c0_i32_1 = arith.constant 0 : i32
    return %c0_i32, %c0_i32_0 : i32, i32
  }
  func.func @transform_4(%arg0: i32) -> (i32, i32) {
    %c0_i32 = arith.constant 0 : i32
    %c0_i32_0 = arith.constant 0 : i32
    %c0_i32_1 = arith.constant 0 : i32
    return %c0_i32, %c0_i32_0 : i32, i32
  }
  func.func @transform_5(%arg0: i32) -> (i32, i32) {
    %c0_i32 = arith.constant 0 : i32
    %c0_i32_0 = arith.constant 0 : i32
    return %c0_i32, %arg0 : i32, i32
  }
}

</mosaic_0001>

<llo_original>
// kernel: tpu_custom_call.1
$region0: #{tpu_custom_call.1}
  #allocation0 [shape = 'u32[]', space=smem, size = 0x4, offset = 0x4, fixed_abs, tag = 'smem constant byte address 0x4 - core index']
  #allocation1 [shape = 'u32[72,128]{1,0:T(1,128)}', space=vmem, size = 0x9000, scoped, tag = 'internal scratch']
  #allocation2 [shape = 'f32[1,1]{1,0:T(1,128)S(1)}', space=vmem, size = 0x200, scoped, tag = 'scoped memory for tpu_custom_call.1']
  %s0 = inlined_call_operand.vmem [shape: f32[4,8], index: 0, kind: input, shape index: {}]
  %s1 = inlined_call_operand.vmem [shape: f32[128,4], index: 1, kind: input, shape index: {}]
  %s2 = inlined_call_operand.vmem [shape: f32[128,1], index: 2, kind: input, shape index: {}]
  %s3 = inlined_call_operand.vmem [shape: f32[128,1], index: 3, kind: input, shape index: {}]
  %s4 = inlined_call_operand.<no memory space> [shape: f32[1,1], index: 4, kind: input, shape index: {}]
  %s5 = inlined_call_operand.hbm [shape: f32[2,8], index: 5, kind: output, shape index: {}]
  %s6 = sld [smem:[#allocation0]]
  $region30: #{tpu_custom_call.1} parent=0
    _
  %s8 = ssub.s32 1, %s6
  %s9 = scalar_select 0, %s8, %s6
  %v10 = vstv %s4
  %11 = vst [vmem:[#allocation2] sm:$0x1] %v10
  $region1: #{tpu_custom_call.1} parent=0
    #allocation3 [shape = 'u8[1024]{0}', space=vmem, size = 0x400, scoped, tag = 'output window, operand 0, single buffered']
    #allocation4 [shape = 's32[1]{0}', space=sflag, size = 0x4, scoped, tag = 'scoped memory for tpu_custom_call.1']
    %12 = vsyncpa [#allocation4], 0
    // Predicated region
    $region2: #{tpu_custom_call.1} parent=1 // pred_check
      _
    $region3: #{tpu_custom_call.1} parent=1 // pred_check_branch
      %14 = sbr.rel (0) target = $region5
    $region4: #{tpu_custom_call.1} parent=1 // pred_region
      _
    $region5: #{tpu_custom_call.1} parent=1 // pred_fallthru
      _
    // Predicated region
    $region6: #{tpu_custom_call.1} parent=1 // pred_check
      _
    $region7: #{tpu_custom_call.1} parent=1 // pred_check_branch
      %16 = sbr.rel (0) target = $region9
    $region8: #{tpu_custom_call.1} parent=1 // pred_region
      _
    $region9: #{tpu_custom_call.1} parent=1 // pred_fallthru
      _
    // Predicated region
    $region10: #{tpu_custom_call.1} parent=1 // pred_check
      _
    $region11: #{tpu_custom_call.1} parent=1 // pred_check_branch
      %18 = sbr.rel (0) target = $region13
    $region12: #{tpu_custom_call.1} parent=1 // pred_region
      _
    $region13: #{tpu_custom_call.1} parent=1 // pred_fallthru
      _
    // Predicated region
    $region14: #{tpu_custom_call.1} parent=1 // pred_check
      _
    $region15: #{tpu_custom_call.1} parent=1 // pred_check_branch
      %20 = sbr.rel (0) target = $region17
    $region16: #{tpu_custom_call.1} parent=1 // pred_region
      _
    $region17: #{tpu_custom_call.1} parent=1 // pred_fallthru
      _
    // Predicated region
    $region18: #{tpu_custom_call.1} parent=1 // pred_check
      _
    $region19: #{tpu_custom_call.1} parent=1 // pred_check_branch
      %22 = sbr.rel (0) target = $region21
    $region20: #{tpu_custom_call.1} parent=1 // pred_region
      _
    $region21: #{tpu_custom_call.1} parent=1 // pred_fallthru
      _
    %v23 = vld [vmem:[%s0] sm:$0xf]
    %v24 = vld [vmem:[%s1] sm:$0xff]
    %v25 = vld [vmem:[%s1 + $0x8] sm:$0xff]
    %v26 = vld [vmem:[%s1 + $0x10] sm:$0xff]
    %v27 = vld [vmem:[%s1 + $0x18] sm:$0xff]
    %v28 = vld [vmem:[%s1 + $0x20] sm:$0xff]
    %v29 = vld [vmem:[%s1 + $0x28] sm:$0xff]
    %v30 = vld [vmem:[%s1 + $0x30] sm:$0xff]
    %v31 = vld [vmem:[%s1 + $0x38] sm:$0xff]
    %v32 = vld [vmem:[%s1 + $0x40] sm:$0xff]
    %v33 = vld [vmem:[%s1 + $0x48] sm:$0xff]
    %v34 = vld [vmem:[%s1 + $0x50] sm:$0xff]
    %v35 = vld [vmem:[%s1 + $0x58] sm:$0xff]
    %v36 = vld [vmem:[%s1 + $0x60] sm:$0xff]
    %v37 = vld [vmem:[%s1 + $0x68] sm:$0xff]
    %v38 = vld [vmem:[%s1 + $0x70] sm:$0xff]
    %v39 = vld [vmem:[%s1 + $0x78] sm:$0xff]
    %v40 = vld [vmem:[%s2] sm:$0xff]
    %v41 = vld [vmem:[%s2 + $0x8] sm:$0xff]
    %v42 = vld [vmem:[%s2 + $0x10] sm:$0xff]
    %v43 = vld [vmem:[%s2 + $0x18] sm:$0xff]
    %v44 = vld [vmem:[%s2 + $0x20] sm:$0xff]
    %v45 = vld [vmem:[%s2 + $0x28] sm:$0xff]
    %v46 = vld [vmem:[%s2 + $0x30] sm:$0xff]
    %v47 = vld [vmem:[%s2 + $0x38] sm:$0xff]
    %v48 = vld [vmem:[%s2 + $0x40] sm:$0xff]
    %v49 = vld [vmem:[%s2 + $0x48] sm:$0xff]
    %v50 = vld [vmem:[%s2 + $0x50] sm:$0xff]
    %v51 = vld [vmem:[%s2 + $0x58] sm:$0xff]
    %v52 = vld [vmem:[%s2 + $0x60] sm:$0xff]
    %v53 = vld [vmem:[%s2 + $0x68] sm:$0xff]
    %v54 = vld [vmem:[%s2 + $0x70] sm:$0xff]
    %v55 = vld [vmem:[%s2 + $0x78] sm:$0xff]
    %v56 = vld [vmem:[%s3] sm:$0xff]
    %v57 = vld [vmem:[%s3 + $0x8] sm:$0xff]
    %v58 = vld [vmem:[%s3 + $0x10] sm:$0xff]
    %v59 = vld [vmem:[%s3 + $0x18] sm:$0xff]
    %v60 = vld [vmem:[%s3 + $0x20] sm:$0xff]
    %v61 = vld [vmem:[%s3 + $0x28] sm:$0xff]
    %v62 = vld [vmem:[%s3 + $0x30] sm:$0xff]
    %v63 = vld [vmem:[%s3 + $0x38] sm:$0xff]
    %v64 = vld [vmem:[%s3 + $0x40] sm:$0xff]
    %v65 = vld [vmem:[%s3 + $0x48] sm:$0xff]
    %v66 = vld [vmem:[%s3 + $0x50] sm:$0xff]
    %v67 = vld [vmem:[%s3 + $0x58] sm:$0xff]
    %v68 = vld [vmem:[%s3 + $0x60] sm:$0xff]
    %v69 = vld [vmem:[%s3 + $0x68] sm:$0xff]
    %v70 = vld [vmem:[%s3 + $0x70] sm:$0xff]
    %v71 = vld [vmem:[%s3 + $0x78] sm:$0xff]
    %v72 = vld [vmem:[#allocation2] sm:$0x1]
    %74 = vset.pattern.permute.xlu0 0
    %75 = vperm.xlu0 %74, %v24
    %v76 = vpop.permute.xlu0 %75
    %79 = vset.pattern.permute.xlu0 0
    %80 = vperm.xlu0 %79, %v25
    %v81 = vpop.permute.xlu0 %80
    %84 = vset.pattern.permute.xlu0 0
    %85 = vperm.xlu0 %84, %v26
    %v86 = vpop.permute.xlu0 %85
    %89 = vset.pattern.permute.xlu0 0
    %90 = vperm.xlu0 %89, %v27
    %v91 = vpop.permute.xlu0 %90
    %94 = vset.pattern.permute.xlu0 0
    %95 = vperm.xlu0 %94, %v28
    %v96 = vpop.permute.xlu0 %95
    %99 = vset.pattern.permute.xlu0 0
    %100 = vperm.xlu0 %99, %v29
    %v101 = vpop.permute.xlu0 %100
    %104 = vset.pattern.permute.xlu0 0
    %105 = vperm.xlu0 %104, %v30
    %v106 = vpop.permute.xlu0 %105
    %109 = vset.pattern.permute.xlu0 0
    %110 = vperm.xlu0 %109, %v31
    %v111 = vpop.permute.xlu0 %110
    %114 = vset.pattern.permute.xlu0 0
    %115 = vperm.xlu0 %114, %v32
    %v116 = vpop.permute.xlu0 %115
    %119 = vset.pattern.permute.xlu0 0
    %120 = vperm.xlu0 %119, %v33
    %v121 = vpop.permute.xlu0 %120
    %124 = vset.pattern.permute.xlu0 0
    %125 = vperm.xlu0 %124, %v34
    %v126 = vpop.permute.xlu0 %125
    %129 = vset.pattern.permute.xlu0 0
    %130 = vperm.xlu0 %129, %v35
    %v131 = vpop.permute.xlu0 %130
    %134 = vset.pattern.permute.xlu0 0
    %135 = vperm.xlu0 %134, %v36
    %v136 = vpop.permute.xlu0 %135
    %139 = vset.pattern.permute.xlu0 0
    %140 = vperm.xlu0 %139, %v37
    %v141 = vpop.permute.xlu0 %140
    %144 = vset.pattern.permute.xlu0 0
    %145 = vperm.xlu0 %144, %v38
    %v146 = vpop.permute.xlu0 %145
    %149 = vset.pattern.permute.xlu0 0
    %150 = vperm.xlu0 %149, %v39
    %v151 = vpop.permute.xlu0 %150
    %v153 = vperm.slane %v23, 0
    %v154 = vmul.f32 %v76, %v153
    %v155 = vmul.f32 %v81, %v153
    %v156 = vmul.f32 %v86, %v153
    %v157 = vmul.f32 %v91, %v153
    %v158 = vmul.f32 %v96, %v153
    %v159 = vmul.f32 %v101, %v153
    %v160 = vmul.f32 %v106, %v153
    %v161 = vmul.f32 %v111, %v153
    %v162 = vmul.f32 %v116, %v153
    %v163 = vmul.f32 %v121, %v153
    %v164 = vmul.f32 %v126, %v153
    %v165 = vmul.f32 %v131, %v153
    %v166 = vmul.f32 %v136, %v153
    %v167 = vmul.f32 %v141, %v153
    %v168 = vmul.f32 %v146, %v153
    %v169 = vmul.f32 %v151, %v153
    %171 = vset.pattern.permute.xlu0 0
    %172 = vperm.xlu0 %171, %v40
    %v173 = vpop.permute.xlu0 %172
    %176 = vset.pattern.permute.xlu0 0
    %177 = vperm.xlu0 %176, %v41
    %v178 = vpop.permute.xlu0 %177
    %181 = vset.pattern.permute.xlu0 0
    %182 = vperm.xlu0 %181, %v42
    %v183 = vpop.permute.xlu0 %182
    %186 = vset.pattern.permute.xlu0 0
    %187 = vperm.xlu0 %186, %v43
    %v188 = vpop.permute.xlu0 %187
    %191 = vset.pattern.permute.xlu0 0
    %192 = vperm.xlu0 %191, %v44
    %v193 = vpop.permute.xlu0 %192
    %196 = vset.pattern.permute.xlu0 0
    %197 = vperm.xlu0 %196, %v45
    %v198 = vpop.permute.xlu0 %197
    %201 = vset.pattern.permute.xlu0 0
    %202 = vperm.xlu0 %201, %v46
    %v203 = vpop.permute.xlu0 %202
    %206 = vset.pattern.permute.xlu0 0
    %207 = vperm.xlu0 %206, %v47
    %v208 = vpop.permute.xlu0 %207
    %211 = vset.pattern.permute.xlu0 0
    %212 = vperm.xlu0 %211, %v48
    %v213 = vpop.permute.xlu0 %212
    %216 = vset.pattern.permute.xlu0 0
    %217 = vperm.xlu0 %216, %v49
    %v218 = vpop.permute.xlu0 %217
    %221 = vset.pattern.permute.xlu0 0
    %222 = vperm.xlu0 %221, %v50
    %v223 = vpop.permute.xlu0 %222
    %226 = vset.pattern.permute.xlu0 0
    %227 = vperm.xlu0 %226, %v51
    %v228 = vpop.permute.xlu0 %227
    %231 = vset.pattern.permute.xlu0 0
    %232 = vperm.xlu0 %231, %v52
    %v233 = vpop.permute.xlu0 %232
    %236 = vset.pattern.permute.xlu0 0
    %237 = vperm.xlu0 %236, %v53
    %v238 = vpop.permute.xlu0 %237
    %241 = vset.pattern.permute.xlu0 0
    %242 = vperm.xlu0 %241, %v54
    %v243 = vpop.permute.xlu0 %242
    %246 = vset.pattern.permute.xlu0 0
    %247 = vperm.xlu0 %246, %v55
    %v248 = vpop.permute.xlu0 %247
    %v250 = vadd.f32 %v154, %v173
    %v251 = vadd.f32 %v155, %v178
    %v252 = vadd.f32 %v156, %v183
    %v253 = vadd.f32 %v157, %v188
    %v254 = vadd.f32 %v158, %v193
    %v255 = vadd.f32 %v159, %v198
    %v256 = vadd.f32 %v160, %v203
    %v257 = vadd.f32 %v161, %v208
    %v258 = vadd.f32 %v162, %v213
    %v259 = vadd.f32 %v163, %v218
    %v260 = vadd.f32 %v164, %v223
    %v261 = vadd.f32 %v165, %v228
    %v262 = vadd.f32 %v166, %v233
    %v263 = vadd.f32 %v167, %v238
    %v264 = vadd.f32 %v168, %v243
    %v265 = vadd.f32 %v169, %v248
    %266 = vset.pattern.permute.xlu0 1
    %267 = vperm.xlu0 %266, %v24
    %v268 = vpop.permute.xlu0 %267
    %270 = vset.pattern.permute.xlu0 1
    %271 = vperm.xlu0 %270, %v25
    %v272 = vpop.permute.xlu0 %271
    %274 = vset.pattern.permute.xlu0 1
    %275 = vperm.xlu0 %274, %v26
    %v276 = vpop.permute.xlu0 %275
    %278 = vset.pattern.permute.xlu0 1
    %279 = vperm.xlu0 %278, %v27
    %v280 = vpop.permute.xlu0 %279
    %282 = vset.pattern.permute.xlu0 1
    %283 = vperm.xlu0 %282, %v28
    %v284 = vpop.permute.xlu0 %283
    %286 = vset.pattern.permute.xlu0 1
    %287 = vperm.xlu0 %286, %v29
    %v288 = vpop.permute.xlu0 %287
    %290 = vset.pattern.permute.xlu0 1
    %291 = vperm.xlu0 %290, %v30
    %v292 = vpop.permute.xlu0 %291
    %294 = vset.pattern.permute.xlu0 1
    %295 = vperm.xlu0 %294, %v31
    %v296 = vpop.permute.xlu0 %295
    %298 = vset.pattern.permute.xlu0 1
    %299 = vperm.xlu0 %298, %v32
    %v300 = vpop.permute.xlu0 %299
    %302 = vset.pattern.permute.xlu0 1
    %303 = vperm.xlu0 %302, %v33
    %v304 = vpop.permute.xlu0 %303
    %306 = vset.pattern.permute.xlu0 1
    %307 = vperm.xlu0 %306, %v34
    %v308 = vpop.permute.xlu0 %307
    %310 = vset.pattern.permute.xlu0 1
    %311 = vperm.xlu0 %310, %v35
    %v312 = vpop.permute.xlu0 %311
    %314 = vset.pattern.permute.xlu0 1
    %315 = vperm.xlu0 %314, %v36
    %v316 = vpop.permute.xlu0 %315
    %318 = vset.pattern.permute.xlu0 1
    %319 = vperm.xlu0 %318, %v37
    %v320 = vpop.permute.xlu0 %319
    %322 = vset.pattern.permute.xlu0 1
    %323 = vperm.xlu0 %322, %v38
    %v324 = vpop.permute.xlu0 %323
    %326 = vset.pattern.permute.xlu0 1
    %327 = vperm.xlu0 %326, %v39
    %v328 = vpop.permute.xlu0 %327
    %v330 = vperm.slane %v23, 1
    %v331 = vmul.f32 %v268, %v330
    %v332 = vmul.f32 %v272, %v330
    %v333 = vmul.f32 %v276, %v330
    %v334 = vmul.f32 %v280, %v330
    %v335 = vmul.f32 %v284, %v330
    %v336 = vmul.f32 %v288, %v330
    %v337 = vmul.f32 %v292, %v330
    %v338 = vmul.f32 %v296, %v330
    %v339 = vmul.f32 %v300, %v330
    %v340 = vmul.f32 %v304, %v330
    %v341 = vmul.f32 %v308, %v330
    %v342 = vmul.f32 %v312, %v330
    %v343 = vmul.f32 %v316, %v330
    %v344 = vmul.f32 %v320, %v330
    %v345 = vmul.f32 %v324, %v330
    %v346 = vmul.f32 %v328, %v330
    %v347 = vadd.f32 %v250, %v331
    %v348 = vadd.f32 %v251, %v332
    %v349 = vadd.f32 %v252, %v333
    %v350 = vadd.f32 %v253, %v334
    %v351 = vadd.f32 %v254, %v335
    %v352 = vadd.f32 %v255, %v336
    %v353 = vadd.f32 %v256, %v337
    %v354 = vadd.f32 %v257, %v338
    %v355 = vadd.f32 %v258, %v339
    %v356 = vadd.f32 %v259, %v340
    %v357 = vadd.f32 %v260, %v341
    %v358 = vadd.f32 %v261, %v342
    %v359 = vadd.f32 %v262, %v343
    %v360 = vadd.f32 %v263, %v344
    %v361 = vadd.f32 %v264, %v345
    %v362 = vadd.f32 %v265, %v346
    %363 = vset.pattern.permute.xlu0 2
    %364 = vperm.xlu0 %363, %v24
    %v365 = vpop.permute.xlu0 %364
    %367 = vset.pattern.permute.xlu0 2
    %368 = vperm.xlu0 %367, %v25
    %v369 = vpop.permute.xlu0 %368
    %371 = vset.pattern.permute.xlu0 2
    %372 = vperm.xlu0 %371, %v26
    %v373 = vpop.permute.xlu0 %372
    %375 = vset.pattern.permute.xlu0 2
    %376 = vperm.xlu0 %375, %v27
    %v377 = vpop.permute.xlu0 %376
    %379 = vset.pattern.permute.xlu0 2
    %380 = vperm.xlu0 %379, %v28
    %v381 = vpop.permute.xlu0 %380
    %383 = vset.pattern.permute.xlu0 2
    %384 = vperm.xlu0 %383, %v29
    %v385 = vpop.permute.xlu0 %384
    %387 = vset.pattern.permute.xlu0 2
    %388 = vperm.xlu0 %387, %v30
    %v389 = vpop.permute.xlu0 %388
    %391 = vset.pattern.permute.xlu0 2
    %392 = vperm.xlu0 %391, %v31
    %v393 = vpop.permute.xlu0 %392
    %395 = vset.pattern.permute.xlu0 2
    %396 = vperm.xlu0 %395, %v32
    %v397 = vpop.permute.xlu0 %396
    %399 = vset.pattern.permute.xlu0 2
    %400 = vperm.xlu0 %399, %v33
    %v401 = vpop.permute.xlu0 %400
    %403 = vset.pattern.permute.xlu0 2
    %404 = vperm.xlu0 %403, %v34
    %v405 = vpop.permute.xlu0 %404
    %407 = vset.pattern.permute.xlu0 2
    %408 = vperm.xlu0 %407, %v35
    %v409 = vpop.permute.xlu0 %408
    %411 = vset.pattern.permute.xlu0 2
    %412 = vperm.xlu0 %411, %v36
    %v413 = vpop.permute.xlu0 %412
    %415 = vset.pattern.permute.xlu0 2
    %416 = vperm.xlu0 %415, %v37
    %v417 = vpop.permute.xlu0 %416
    %419 = vset.pattern.permute.xlu0 2
    %420 = vperm.xlu0 %419, %v38
    %v421 = vpop.permute.xlu0 %420
    %423 = vset.pattern.permute.xlu0 2
    %424 = vperm.xlu0 %423, %v39
    %v425 = vpop.permute.xlu0 %424
    %v427 = vperm.slane %v23, 2
    %v428 = vmul.f32 %v365, %v427
    %v429 = vmul.f32 %v369, %v427
    %v430 = vmul.f32 %v373, %v427
    %v431 = vmul.f32 %v377, %v427
    %v432 = vmul.f32 %v381, %v427
    %v433 = vmul.f32 %v385, %v427
    %v434 = vmul.f32 %v389, %v427
    %v435 = vmul.f32 %v393, %v427
    %v436 = vmul.f32 %v397, %v427
    %v437 = vmul.f32 %v401, %v427
    %v438 = vmul.f32 %v405, %v427
    %v439 = vmul.f32 %v409, %v427
    %v440 = vmul.f32 %v413, %v427
    %v441 = vmul.f32 %v417, %v427
    %v442 = vmul.f32 %v421, %v427
    %v443 = vmul.f32 %v425, %v427
    %v444 = vadd.f32 %v347, %v428
    %v445 = vadd.f32 %v348, %v429
    %v446 = vadd.f32 %v349, %v430
    %v447 = vadd.f32 %v350, %v431
    %v448 = vadd.f32 %v351, %v432
    %v449 = vadd.f32 %v352, %v433
    %v450 = vadd.f32 %v353, %v434
    %v451 = vadd.f32 %v354, %v435
    %v452 = vadd.f32 %v355, %v436
    %v453 = vadd.f32 %v356, %v437
    %v454 = vadd.f32 %v357, %v438
    %v455 = vadd.f32 %v358, %v439
    %v456 = vadd.f32 %v359, %v440
    %v457 = vadd.f32 %v360, %v441
    %v458 = vadd.f32 %v361, %v442
    %v459 = vadd.f32 %v362, %v443
    %460 = vset.pattern.permute.xlu0 3
    %461 = vperm.xlu0 %460, %v24
    %v462 = vpop.permute.xlu0 %461
    %464 = vset.pattern.permute.xlu0 3
    %465 = vperm.xlu0 %464, %v25
    %v466 = vpop.permute.xlu0 %465
    %468 = vset.pattern.permute.xlu0 3
    %469 = vperm.xlu0 %468, %v26
    %v470 = vpop.permute.xlu0 %469
    %472 = vset.pattern.permute.xlu0 3
    %473 = vperm.xlu0 %472, %v27
    %v474 = vpop.permute.xlu0 %473
    %476 = vset.pattern.permute.xlu0 3
    %477 = vperm.xlu0 %476, %v28
    %v478 = vpop.permute.xlu0 %477
    %480 = vset.pattern.permute.xlu0 3
    %481 = vperm.xlu0 %480, %v29
    %v482 = vpop.permute.xlu0 %481
    %484 = vset.pattern.permute.xlu0 3
    %485 = vperm.xlu0 %484, %v30
    %v486 = vpop.permute.xlu0 %485
    %488 = vset.pattern.permute.xlu0 3
    %489 = vperm.xlu0 %488, %v31
    %v490 = vpop.permute.xlu0 %489
    %492 = vset.pattern.permute.xlu0 3
    %493 = vperm.xlu0 %492, %v32
    %v494 = vpop.permute.xlu0 %493
    %496 = vset.pattern.permute.xlu0 3
    %497 = vperm.xlu0 %496, %v33
    %v498 = vpop.permute.xlu0 %497
    %500 = vset.pattern.permute.xlu0 3
    %501 = vperm.xlu0 %500, %v34
    %v502 = vpop.permute.xlu0 %501
    %504 = vset.pattern.permute.xlu0 3
    %505 = vperm.xlu0 %504, %v35
    %v506 = vpop.permute.xlu0 %505
    %508 = vset.pattern.permute.xlu0 3
    %509 = vperm.xlu0 %508, %v36
    %v510 = vpop.permute.xlu0 %509
    %512 = vset.pattern.permute.xlu0 3
    %513 = vperm.xlu0 %512, %v37
    %v514 = vpop.permute.xlu0 %513
    %516 = vset.pattern.permute.xlu0 3
    %517 = vperm.xlu0 %516, %v38
    %v518 = vpop.permute.xlu0 %517
    %520 = vset.pattern.permute.xlu0 3
    %521 = vperm.xlu0 %520, %v39
    %v522 = vpop.permute.xlu0 %521
    %v524 = vperm.slane %v23, 3
    %v525 = vmul.f32 %v462, %v524
    %v526 = vmul.f32 %v466, %v524
    %v527 = vmul.f32 %v470, %v524
    %v528 = vmul.f32 %v474, %v524
    %v529 = vmul.f32 %v478, %v524
    %v530 = vmul.f32 %v482, %v524
    %v531 = vmul.f32 %v486, %v524
    %v532 = vmul.f32 %v490, %v524
    %v533 = vmul.f32 %v494, %v524
    %v534 = vmul.f32 %v498, %v524
    %v535 = vmul.f32 %v502, %v524
    %v536 = vmul.f32 %v506, %v524
    %v537 = vmul.f32 %v510, %v524
    %v538 = vmul.f32 %v514, %v524
    %v539 = vmul.f32 %v518, %v524
    %v540 = vmul.f32 %v522, %v524
    %v541 = vadd.f32 %v444, %v525
    %v542 = vadd.f32 %v445, %v526
    %v543 = vadd.f32 %v446, %v527
    %v544 = vadd.f32 %v447, %v528
    %v545 = vadd.f32 %v448, %v529
    %v546 = vadd.f32 %v449, %v530
    %v547 = vadd.f32 %v450, %v531
    %v548 = vadd.f32 %v451, %v532
    %v549 = vadd.f32 %v452, %v533
    %v550 = vadd.f32 %v453, %v534
    %v551 = vadd.f32 %v454, %v535
    %v552 = vadd.f32 %v455, %v536
    %v553 = vadd.f32 %v456, %v537
    %v554 = vadd.f32 %v457, %v538
    %v555 = vadd.f32 %v458, %v539
    %v556 = vadd.f32 %v459, %v540
    %v557 = vmax.f32 %v541, 0.0
    %v558 = vmax.f32 %v542, 0.0
    %v559 = vmax.f32 %v543, 0.0
    %v560 = vmax.f32 %v544, 0.0
    %v561 = vmax.f32 %v545, 0.0
    %v562 = vmax.f32 %v546, 0.0
    %v563 = vmax.f32 %v547, 0.0
    %v564 = vmax.f32 %v548, 0.0
    %v565 = vmax.f32 %v549, 0.0
    %v566 = vmax.f32 %v550, 0.0
    %v567 = vmax.f32 %v551, 0.0
    %v568 = vmax.f32 %v552, 0.0
    %v569 = vmax.f32 %v553, 0.0
    %v570 = vmax.f32 %v554, 0.0
    %v571 = vmax.f32 %v555, 0.0
    %v572 = vmax.f32 %v556, 0.0
    %574 = vset.pattern.permute.xlu0 0
    %575 = vperm.xlu0 %574, %v56
    %v576 = vpop.permute.xlu0 %575
    %579 = vset.pattern.permute.xlu0 0
    %580 = vperm.xlu0 %579, %v57
    %v581 = vpop.permute.xlu0 %580
    %584 = vset.pattern.permute.xlu0 0
    %585 = vperm.xlu0 %584, %v58
    %v586 = vpop.permute.xlu0 %585
    %589 = vset.pattern.permute.xlu0 0
    %590 = vperm.xlu0 %589, %v59
    %v591 = vpop.permute.xlu0 %590
    %594 = vset.pattern.permute.xlu0 0
    %595 = vperm.xlu0 %594, %v60
    %v596 = vpop.permute.xlu0 %595
    %599 = vset.pattern.permute.xlu0 0
    %600 = vperm.xlu0 %599, %v61
    %v601 = vpop.permute.xlu0 %600
    %604 = vset.pattern.permute.xlu0 0
    %605 = vperm.xlu0 %604, %v62
    %v606 = vpop.permute.xlu0 %605
    %609 = vset.pattern.permute.xlu0 0
    %610 = vperm.xlu0 %609, %v63
    %v611 = vpop.permute.xlu0 %610
    %614 = vset.pattern.permute.xlu0 0
    %615 = vperm.xlu0 %614, %v64
    %v616 = vpop.permute.xlu0 %615
    %619 = vset.pattern.permute.xlu0 0
    %620 = vperm.xlu0 %619, %v65
    %v621 = vpop.permute.xlu0 %620
    %624 = vset.pattern.permute.xlu0 0
    %625 = vperm.xlu0 %624, %v66
    %v626 = vpop.permute.xlu0 %625
    %629 = vset.pattern.permute.xlu0 0
    %630 = vperm.xlu0 %629, %v67
    %v631 = vpop.permute.xlu0 %630
    %634 = vset.pattern.permute.xlu0 0
    %635 = vperm.xlu0 %634, %v68
    %v636 = vpop.permute.xlu0 %635
    %639 = vset.pattern.permute.xlu0 0
    %640 = vperm.xlu0 %639, %v69
    %v641 = vpop.permute.xlu0 %640
    %644 = vset.pattern.permute.xlu0 0
    %645 = vperm.xlu0 %644, %v70
    %v646 = vpop.permute.xlu0 %645
    %649 = vset.pattern.permute.xlu0 0
    %650 = vperm.xlu0 %649, %v71
    %v651 = vpop.permute.xlu0 %650
    %v653 = vmul.f32 %v557, %v576
    %v654 = vmul.f32 %v558, %v581
    %v655 = vmul.f32 %v559, %v586
    %v656 = vmul.f32 %v560, %v591
    %v657 = vmul.f32 %v561, %v596
    %v658 = vmul.f32 %v562, %v601
    %v659 = vmul.f32 %v563, %v606
    %v660 = vmul.f32 %v564, %v611
    %v661 = vmul.f32 %v565, %v616
    %v662 = vmul.f32 %v566, %v621
    %v663 = vmul.f32 %v567, %v626
    %v664 = vmul.f32 %v568, %v631
    %v665 = vmul.f32 %v569, %v636
    %v666 = vmul.f32 %v570, %v641
    %v667 = vmul.f32 %v571, %v646
    %v668 = vmul.f32 %v572, %v651
    %vm669 = vcmask 64512
    %v670 = vsel %vm669, %v653, 0.0
    %v671 = vsel %vm669, %v654, 0.0
    %v672 = vadd.f32 %v670, %v671
    %v673 = vsel %vm669, %v655, 0.0
    %v674 = vadd.f32 %v672, %v673
    %v675 = vsel %vm669, %v656, 0.0
    %v676 = vadd.f32 %v674, %v675
    %v677 = vsel %vm669, %v657, 0.0
    %v678 = vadd.f32 %v676, %v677
    %v679 = vsel %vm669, %v658, 0.0
    %v680 = vadd.f32 %v678, %v679
    %v681 = vsel %vm669, %v659, 0.0
    %v682 = vadd.f32 %v680, %v681
    %v683 = vsel %vm669, %v660, 0.0
    %v684 = vadd.f32 %v682, %v683
    %v685 = vsel %vm669, %v661, 0.0
    %v686 = vadd.f32 %v684, %v685
    %v687 = vsel %vm669, %v662, 0.0
    %v688 = vadd.f32 %v686, %v687
    %v689 = vsel %vm669, %v663, 0.0
    %v690 = vadd.f32 %v688, %v689
    %v691 = vsel %vm669, %v664, 0.0
    %v692 = vadd.f32 %v690, %v691
    %v693 = vsel %vm669, %v665, 0.0
    %v694 = vadd.f32 %v692, %v693
    %v695 = vsel %vm669, %v666, 0.0
    %v696 = vadd.f32 %v694, %v695
    %v697 = vsel %vm669, %v667, 0.0
    %v698 = vadd.f32 %v696, %v697
    %v699 = vsel %vm669, %v668, 0.0
    %v700 = vadd.f32 %v698, %v699
    %v701 = vrot.slane %v700, 4
    %v702 = vadd.f32 %v700, %v701
    %v703 = vrot.slane %v702, 2
    %v704 = vadd.f32 %v702, %v703
    %v705 = vrot.slane %v704, 1
    %v706 = vadd.f32 %v704, %v705
    %708 = vset.pattern.permute.xlu0 0
    %709 = vperm.xlu0 %708, %v72
    %v710 = vpop.permute.xlu0 %709
    %v712 = vperm.slane %v710, 0
    %v713 = vadd.f32 %v706, %v712
    %v714 = vsub.f32 0.0, %v713
    %v715 = vmul.f32 %v714, 1.442695
    %v716 = vpow.pop %v715
    %v717 = vadd.f32 %v716, 1.0
    %v718 = vrcp.pop %v717
    %v719 = vmul.f32 %v717, %v718
    %v720 = vsub.f32 1.0, %v719
    %v721 = vmul.f32 %v718, %v720
    %v722 = vadd.f32 %v718, %v721
    %vm723 = vweird.f32 %v717
    %vm724 = vweird.f32 %v718
    %vm725 = vmor %vm723, %vm724
    %v726 = vsel %vm725, %v718, %v722
    %v727 = vand.u32 2147483647, %v717
    %vm728 = vcmp.eq.f32.partialorder %v727, 8.507059e+37
    %v729 = vand.u32 %v717, 2147483648
    %v730 = vor.u32 1.1754944e-38, %v729
    %v731 = vsel %vm728, %v730, %v726
    %v732 = vmul.f32 1.0, %v731
    %vm733 = vcmask 57344
    %734 = vst.msk [vmem:[#allocation3 + $0x1] sm:$0x1] %vm733, %v732
    %v735 = vsub.f32 1.0, %v732
    %736 = vst.msk [vmem:[#allocation3] sm:$0x1] %vm733, %v735
    // Predicated region
    $region22: #{tpu_custom_call.1} parent=1 // pred_check
      _
    $region23: #{tpu_custom_call.1} parent=1 // pred_check_branch
      %738 = sbr.rel (0) target = $region25
    $region24: #{tpu_custom_call.1} parent=1 // pred_region
      %740 = vsyncadd [#allocation4], 0
      %s742 = sshll.u32 [#allocation3], 4
      %s743 = int_to_ptr.vmem [resolvable:$true] %s742
      %s744 = sshll.u32 %s5, 4
      %s745 = int_to_ptr.hbm [resolvable:$true] %s744
      %747 = dma.vmem_to_hbm [thread:$0]  %s743, 32, %s745, [#allocation4]
    $region25: #{tpu_custom_call.1} parent=1 // pred_fallthru
      _
    // Predicated region
    $region26: #{tpu_custom_call.1} parent=1 // pred_check
      _
    $region27: #{tpu_custom_call.1} parent=1 // pred_check_branch
      %749 = sbr.rel (0) target = $region29
    $region28: #{tpu_custom_call.1} parent=1 // pred_region
      %751 = dma.done [#allocation4], 32
    $region29: #{tpu_custom_call.1} parent=1 // pred_fallthru
      _
    %752 = vsyncpa [#allocation4], 1

</llo_original>
